<compile_context>
chip_gen: v7x
topology: tpu7x:2x2x1
jax: 0.10.0
libtpu: 0.0.40
codegen_flags: <defaults>
</compile_context>

<pallas_src>
import jax
import jax.numpy as jnp
from jax.experimental import pallas as pl
from jax.experimental.pallas import tpu as pltpu


def _cdiv(a, b):
    return -(-a // b)


def _round_up(a, b):
    return _cdiv(a, b) * b


def _make_packed_kernel(c_pad, g):
    """Match-count kernel on lane-packed logits: blocks (R, 128) + targets (R, g)."""

    def kernel(logits_ref, tgt_ref, out_ref, acc_ref):
        j = pl.program_id(1)

        @pl.when(j == 0)
        def _init():
            acc_ref[...] = jnp.zeros_like(acc_ref)

        x = logits_ref[...]                                     # (R, 128), bf16 or f32
        lane = jax.lax.broadcasted_iota(jnp.int32, x.shape, 1)
        idx = (lane & (c_pad - 1)).astype(jnp.float32)          # in-group class index

        # Paired (value, index) shift-reduce over each aligned group of c_pad lanes.
        # After log2(c_pad) doubling steps the *first lane of every group* holds the
        # group's (max value, first-occurrence argmax) — torch.argmax tie-breaking.
        # Other lanes are contaminated by the next group, but only group-start lanes
        # are read by the selector matmul below.  One roll per operand per step keeps
        # the XLU load at half of a full butterfly + broadcast.
        v, i = x, idx
        s = 1
        while s < c_pad:
            pv = pltpu.roll(v, 128 - s, 1)                      # value from lane l + s
            pi = pltpu.roll(i, 128 - s, 1)
            take = jnp.logical_or(pv > v, jnp.logical_and(pv == v, pi < i))
            v = jnp.where(take, pv, v)
            i = jnp.where(take, pi, i)
            s *= 2

        # Compact one argmax per group with a 0/1 selector matmul on the (idle) MXU
        # (exact for small integer values): (R, 128) @ (128, g) -> (R, g).
        li = jax.lax.broadcasted_iota(jnp.int32, (128, g), 0)
        ki = jax.lax.broadcasted_iota(jnp.int32, (128, g), 1)
        sel = (li == ki * c_pad).astype(jnp.float32)
        amax = jnp.dot(i, sel, preferred_element_type=jnp.float32)   # (R, g)

        tgt = tgt_ref[...]                                      # (R, g) f32, -1 == padding
        match = jnp.logical_and(amax == tgt, tgt >= 0.0)
        # per-lane partial sums; the cross-lane reduction is deferred to the flush
        acc_ref[...] += jnp.sum(match.astype(jnp.float32), axis=0, keepdims=True)

        @pl.when(j == pl.num_programs(1) - 1)
        def _flush():
            # fill this core's (8,128) output block with its partial match count
            out_ref[...] = jnp.zeros_like(out_ref) + jnp.sum(acc_ref[...])

    return kernel


def _make_row_kernel(num_classes):
    """Match-count kernel on (rows, C) blocks (C > 64: already lane-dense)."""

    def kernel(logits_ref, tgt_ref, out_ref, acc_ref):
        j = pl.program_id(1)

        @pl.when(j == 0)
        def _init():
            acc_ref[...] = jnp.zeros_like(acc_ref)

        x = logits_ref[...]                                     # (R, C)
        col = jax.lax.broadcasted_iota(jnp.int32, x.shape, 1)
        row_max = jnp.max(x, axis=-1, keepdims=True)
        # first-occurrence argmax (torch.argmax tie-breaking)
        amax = jnp.min(jnp.where(x == row_max, col, num_classes),
                       axis=-1, keepdims=True)                  # (R, 1) int32

        tgt = tgt_ref[...]                                      # (R, 1) int32, -1 == padding
        match = jnp.logical_and(amax == tgt, tgt >= 0)
        acc_ref[...] += jnp.sum(match.astype(jnp.float32), keepdims=True)

        @pl.when(j == pl.num_programs(1) - 1)
        def _flush():
            out_ref[...] = jnp.zeros_like(out_ref) + acc_ref[...]

    return kernel


def _count_matches(kernel, data, tgt, block_rows, ncores, n_inner, acc_cols):
    rows, lanes = data.shape
    tcols = tgt.shape[1]
    out = pl.pallas_call(
        kernel,
        out_shape=jax.ShapeDtypeStruct((ncores * 8, 128), jnp.float32),
        grid_spec=pltpu.PrefetchScalarGridSpec(
            num_scalar_prefetch=0,
            grid=(ncores, n_inner),
            in_specs=[
                pl.BlockSpec((block_rows, lanes), lambda i, j: (i * n_inner + j, 0)),
                pl.BlockSpec((block_rows, tcols), lambda i, j: (i * n_inner + j, 0)),
            ],
            out_specs=pl.BlockSpec((8, 128), lambda i, j: (i, 0)),
            scratch_shapes=[pltpu.VMEM((1, acc_cols), jnp.float32)],
        ),
        compiler_params=pltpu.CompilerParams(
            # leading axis: v7x megacore split; trailing axis: reduction (resident acc)
            dimension_semantics=("parallel", "arbitrary"),
            vmem_limit_bytes=32 * 1024 * 1024,   # safe on v5e/v6e (128 MiB) and v7x (64 MiB)
        ),
    )(data, tgt)
    # sublane [i*8, 0] of each core's block holds that core's partial count
    return jnp.sum(out[0::8, 0])


def multiclass_cm_with_logits(logits, target, weight=None, *, block_bytes=2 * 1024 * 1024):
    """Confusion-matrix counts for (N, C) logits and (N,) integer targets."""
    logits = jnp.asarray(logits)
    target = jnp.asarray(target)
    N, C = logits.shape

    if weight is None:
        w = jnp.float32(1.0)
    else:
        # TODO(synk): only a scalar weight is supported (the module's default);
        # per-element weight tensors are not plumbed through.
        w = jnp.asarray(weight, jnp.float32).reshape(())

    if N == 0:
        z = jnp.float32(0.0)
        return {"TP": z, "FP": z, "TN": z, "FN": z}

    if logits.dtype != jnp.bfloat16 and logits.dtype != jnp.float32:
        logits = logits.astype(jnp.float32)
    elt = logits.dtype.itemsize
    tgt_i32 = target.astype(jnp.int32)

    c_pad = 1 << max(0, C - 1).bit_length()          # next power of two >= C
    if c_pad <= 64:
        # ---- lane-dense packed path: 128 // c_pad sample rows per vreg row ----
        g = 128 // c_pad
        r_cap = max(8, min(4096, (block_bytes // (128 * elt)) // 8 * 8))
        p = _cdiv(N, g)
        r = min(r_cap, _round_up(p, 8))
        ncores = 2 if _cdiv(p, r) >= 2 else 1
        n_inner = _cdiv(p, r * ncores)
        p_pad = n_inner * ncores * r
        n_pad = p_pad * g

        lg = logits
        if n_pad != N or c_pad != C:
            # padded classes/rows get -inf so they can never win the argmax
            lg = jnp.pad(lg, ((0, n_pad - N), (0, c_pad - C)), constant_values=-jnp.inf)
        lg = lg.reshape(p_pad, 128)                  # free row-major repack

        tg = jnp.pad(tgt_i32, (0, n_pad - N), constant_values=-1)
        tg = tg.astype(jnp.float32).reshape(p_pad, g)

        matches = _count_matches(_make_packed_kernel(c_pad, g), lg, tg, r, ncores, n_inner, g)
    else:
        # ---- wide-class fallback: (rows, C) blocks are already lane-dense ----
        r_cap = max(8, min(8192, (block_bytes // (C * elt)) // 8 * 8))
        r = min(r_cap, _round_up(N, 8))
        ncores = 2 if _cdiv(N, r) >= 2 else 1
        n_inner = _cdiv(N, r * ncores)
        n_pad = n_inner * ncores * r

        lg = logits if n_pad == N else jnp.pad(logits, ((0, n_pad - N), (0, 0)))
        tg = jnp.pad(tgt_i32, (0, n_pad - N), constant_values=-1).reshape(n_pad, 1)

        matches = _count_matches(_make_row_kernel(C), lg, tg, r, ncores, n_inner, 1)

    # Algebraic confusion matrix for a scalar weight and in-range targets.
    n = jnp.float32(N)
    return {
        "TP": w * matches,
        "FP": w * (n - matches),
        "TN": w * (n * (C - 2) + matches),
        "FN": w * (n - matches),
    }


def _reference(logits, target, weight=1.0):
    C = logits.shape[-1]
    w = jnp.float32(weight)
    pred_oh = jax.nn.one_hot(jnp.argmax(logits, axis=-1), C, dtype=jnp.float32)
    lbl_oh = jax.nn.one_hot(target, C, dtype=jnp.float32)
    return {
        "TP": jnp.sum(pred_oh * lbl_oh * w),
        "FP": jnp.sum(pred_oh * (1.0 - lbl_oh) * w),
        "TN": jnp.sum((1.0 - pred_oh) * (1.0 - lbl_oh) * w),
        "FN": jnp.sum((1.0 - pred_oh) * lbl_oh * w),
    }


def _check(out, ref, name):
    for k in ("TP", "FP", "TN", "FN"):
        got, want = float(out[k]), float(ref[k])
        assert got == want, (name, k, got, want)


if __name__ == "__main__":
    key = jax.random.PRNGKey(0)
    k1, k2, k3, k4, k5, k6, k7, k8 = jax.random.split(key, 8)

    # 1) packed lane-dense path: multiple grid blocks, 2-way parallel split,
    #    row & class padding, scalar weight.  (num_classes=6, N=1000)
    n1, c1 = 1000, 6
    logits1 = jax.random.normal(k1, (n1, c1), dtype=jnp.float32)
    target1 = jax.random.randint(k2, (n1,), 0, c1, dtype=jnp.int32)
    out1 = multiclass_cm_with_logits(logits1, target1, weight=2.5, block_bytes=4096)
    out1 = {k: jax.block_until_ready(v) for k, v in out1.items()}
    _check(out1, _reference(logits1, target1, 2.5), "packed-f32")

    # 2) packed path with bf16 logits, single block.  (num_classes=8, N=100)
    n2, c2 = 100, 8
    logits2 = jax.random.normal(k3, (n2, c2), dtype=jnp.float32).astype(jnp.bfloat16)
    target2 = jax.random.randint(k4, (n2,), 0, c2, dtype=jnp.int32)
    out2 = multiclass_cm_with_logits(logits2, target2)
    out2 = {k: jax.block_until_ready(v) for k, v in out2.items()}
    _check(out2, _reference(logits2, target2), "packed-bf16")

    # 3) wide-class fallback path.  (num_classes=130, N=24)
    n3, c3 = 24, 130
    logits3 = jax.random.normal(k5, (n3, c3), dtype=jnp.float32)
    target3 = jax.random.randint(k6, (n3,), 0, c3, dtype=jnp.int32)
    out3 = multiclass_cm_with_logits(logits3, target3)
    out3 = {k: jax.block_until_ready(v) for k, v in out3.items()}
    _check(out3, _reference(logits3, target3), "row-f32")

    # 4) tie-heavy logits: verifies torch-style first-occurrence argmax tie-breaking.
    n4, c4 = 64, 6
    logits4 = jax.random.randint(k7, (n4, c4), 0, 3, dtype=jnp.int32).astype(jnp.float32)
    target4 = jax.random.randint(k8, (n4,), 0, c4, dtype=jnp.int32)
    out4 = multiclass_cm_with_logits(logits4, target4)
    out4 = {k: jax.block_until_ready(v) for k, v in out4.items()}
    _check(out4, _reference(logits4, target4), "packed-ties")

    print("KERNEL_OK")
</pallas_src>

<mosaic_0001>
module attributes {stable_mosaic.version = 11 : i64} {
  func.func @kernel(%arg0: i32, %arg1: i32, %arg2: memref<8x128xf32, #tpu.memory_space<vmem>>, %arg3: memref<8x16xf32, #tpu.memory_space<vmem>>, %arg4: memref<8x128xf32, #tpu.memory_space<vmem>>, %arg5: memref<1x16xf32, #tpu.memory_space<vmem>>) attributes {dimension_semantics = [#tpu.dimension_semantics<parallel>, #tpu.dimension_semantics<arbitrary>], iteration_bounds = array<i64: 2, 4>, scalar_prefetch = 0 : i64, scratch_operands = 1 : i64, tpu.core_type = #tpu.core_type<tc>, window_params = [{transform_indices = @transform_0, window_bounds = array<i64: 8, 128>}, {transform_indices = @transform_1, window_bounds = array<i64: 8, 16>}, {transform_indices = @transform_2, window_bounds = array<i64: 8, 128>}]} {
    %c0_i32 = arith.constant 0 : i32
    %0 = arith.cmpi eq, %arg1, %c0_i32 : i32
    %1 = arith.extui %0 : i1 to i32
    %c0_i32_0 = arith.constant 0 : i32
    %2 = arith.cmpi ne, %1, %c0_i32_0 : i32
    scf.if %2 {
      %cst_14 = arith.constant 0.000000e+00 : f32
      %57 = vector.broadcast %cst_14 : f32 to vector<1x16xf32>
      %c0_15 = arith.constant 0 : index
      %c0_16 = arith.constant 0 : index
      %58 = vector.load %arg5[%c0_15, %c0_16] : memref<1x16xf32, #tpu.memory_space<vmem>>, vector<1x16xf32>
      tpu.vector_store %arg5[%c0_15, %c0_16], %57 {strides = array<i32>} : memref<1x16xf32, #tpu.memory_space<vmem>>, vector<1x16xf32>,
    } else {
    }
    %c0 = arith.constant 0 : index
    %c0_1 = arith.constant 0 : index
    %3 = vector.load %arg2[%c0, %c0_1] : memref<8x128xf32, #tpu.memory_space<vmem>>, vector<8x128xf32>
    %4 = tpu.iota {dimensions = array<i32: 1>} : vector<8x128xi32>
    %c7_i32 = arith.constant 7 : i32
    %5 = vector.broadcast %c7_i32 : i32 to vector<8x128xi32>
    %6 = arith.andi %4, %5 : vector<8x128xi32>
    %7 = arith.sitofp %6 : vector<8x128xi32> to vector<8x128xf32>
    %c127_i32 = arith.constant 127 : i32
    %8 = tpu.dynamic_rotate %3 by %c127_i32 dim 1 : vector<8x128xf32>, i32 -> vector<8x128xf32>
    %c127_i32_2 = arith.constant 127 : i32
    %9 = tpu.dynamic_rotate %7 by %c127_i32_2 dim 1 : vector<8x128xf32>, i32 -> vector<8x128xf32>
    %10 = arith.cmpf ogt, %8, %3 : vector<8x128xf32>
    %11 = arith.cmpf oeq, %8, %3 : vector<8x128xf32>
    %12 = arith.cmpf olt, %9, %7 : vector<8x128xf32>
    %13 = arith.andi %11, %12 : vector<8x128xi1>
    %14 = arith.ori %10, %13 : vector<8x128xi1>
    %15 = arith.select %14, %8, %3 : vector<8x128xi1>, vector<8x128xf32>
    %16 = arith.select %14, %9, %7 : vector<8x128xi1>, vector<8x128xf32>
    %c126_i32 = arith.constant 126 : i32
    %17 = tpu.dynamic_rotate %15 by %c126_i32 dim 1 : vector<8x128xf32>, i32 -> vector<8x128xf32>
    %c126_i32_3 = arith.constant 126 : i32
    %18 = tpu.dynamic_rotate %16 by %c126_i32_3 dim 1 : vector<8x128xf32>, i32 -> vector<8x128xf32>
    %19 = arith.cmpf ogt, %17, %15 : vector<8x128xf32>
    %20 = arith.cmpf oeq, %17, %15 : vector<8x128xf32>
    %21 = arith.cmpf olt, %18, %16 : vector<8x128xf32>
    %22 = arith.andi %20, %21 : vector<8x128xi1>
    %23 = arith.ori %19, %22 : vector<8x128xi1>
    %24 = arith.select %23, %17, %15 : vector<8x128xi1>, vector<8x128xf32>
    %25 = arith.select %23, %18, %16 : vector<8x128xi1>, vector<8x128xf32>
    %c124_i32 = arith.constant 124 : i32
    %26 = tpu.dynamic_rotate %24 by %c124_i32 dim 1 : vector<8x128xf32>, i32 -> vector<8x128xf32>
    %c124_i32_4 = arith.constant 124 : i32
    %27 = tpu.dynamic_rotate %25 by %c124_i32_4 dim 1 : vector<8x128xf32>, i32 -> vector<8x128xf32>
    %28 = arith.cmpf ogt, %26, %24 : vector<8x128xf32>
    %29 = arith.cmpf oeq, %26, %24 : vector<8x128xf32>
    %30 = arith.cmpf olt, %27, %25 : vector<8x128xf32>
    %31 = arith.andi %29, %30 : vector<8x128xi1>
    %32 = arith.ori %28, %31 : vector<8x128xi1>
    %33 = arith.select %32, %27, %25 : vector<8x128xi1>, vector<8x128xf32>
    %34 = tpu.iota {dimensions = array<i32: 0>} : vector<128x16xi32>
    %35 = tpu.iota {dimensions = array<i32: 1>} : vector<128x16xi32>
    %c8_i32 = arith.constant 8 : i32
    %36 = vector.broadcast %c8_i32 : i32 to vector<128x16xi32>
    %37 = arith.muli %35, %36 : vector<128x16xi32>
    %38 = arith.cmpi eq, %34, %37 : vector<128x16xi32>
    %39 = arith.extui %38 : vector<128x16xi1> to vector<128x16xi32>
    %40 = arith.sitofp %39 : vector<128x16xi32> to vector<128x16xf32>
    %cst = arith.constant dense<0.000000e+00> : vector<8x16xf32>
    %41 = tpu.matmul %33, %40, %cst {dimension_numbers = #tpu.dot_dimension_numbers<[1], [0], [0], [1], [0, 0, 1, 1], [], []>} : vector<8x128xf32>, vector<128x16xf32>, vector<8x16xf32> -> vector<8x16xf32>
    %c0_5 = arith.constant 0 : index
    %c0_6 = arith.constant 0 : index
    %42 = vector.load %arg3[%c0_5, %c0_6] : memref<8x16xf32, #tpu.memory_space<vmem>>, vector<8x16xf32>
    %43 = arith.cmpf oeq, %41, %42 : vector<8x16xf32>
    %cst_7 = arith.constant 0.000000e+00 : f32
    %44 = vector.broadcast %cst_7 : f32 to vector<8x16xf32>
    %45 = arith.cmpf oge, %42, %44 : vector<8x16xf32>
    %46 = arith.andi %43, %45 : vector<8x16xi1>
    %c0_8 = arith.constant 0 : index
    %c0_9 = arith.constant 0 : index
    %47 = vector.load %arg5[%c0_8, %c0_9] : memref<1x16xf32, #tpu.memory_space<vmem>>, vector<1x16xf32>
    %48 = arith.extui %46 : vector<8x16xi1> to vector<8x16xi32>
    %49 = arith.sitofp %48 : vector<8x16xi32> to vector<8x16xf32>
    %cst_10 = arith.constant dense<0.000000e+00> : vector<16xf32>
    %50 = vector.multi_reduction <add>, %49, %cst_10 [0] : vector<8x16xf32> to vector<16xf32>
    %51 = vector.shape_cast %50 : vector<16xf32> to vector<1x16xf32>
    %52 = arith.addf %47, %51 : vector<1x16xf32>
    %c0_11 = arith.constant 0 : index
    %c0_12 = arith.constant 0 : index
    %53 = vector.load %arg5[%c0_11, %c0_12] : memref<1x16xf32, #tpu.memory_space<vmem>>, vector<1x16xf32>
    tpu.vector_store %arg5[%c0_11, %c0_12], %52 {strides = array<i32>} : memref<1x16xf32, #tpu.memory_space<vmem>>, vector<1x16xf32>,
    %c3_i32 = arith.constant 3 : i32
    %54 = arith.cmpi eq, %arg1, %c3_i32 : i32
    %55 = arith.extui %54 : i1 to i32
    %c0_i32_13 = arith.constant 0 : i32
    %56 = arith.cmpi ne, %55, %c0_i32_13 : i32
    scf.if %56 {
      %cst_14 = arith.constant 0.000000e+00 : f32
      %57 = vector.broadcast %cst_14 : f32 to vector<8x128xf32>
      %c0_15 = arith.constant 0 : index
      %c0_16 = arith.constant 0 : index
      %58 = vector.load %arg5[%c0_15, %c0_16] : memref<1x16xf32, #tpu.memory_space<vmem>>, vector<1x16xf32>
      %59 = vector.shape_cast %58 : vector<1x16xf32> to vector<1x1x16xf32>
      %cst_17 = arith.constant dense<0.000000e+00> : vector<1xf32>
      %60 = vector.multi_reduction <add>, %59, %cst_17 [1, 2] : vector<1x1x16xf32> to vector<1xf32>
      %61 = vector.shape_cast %60 : vector<1xf32> to vector<1x1x1xf32>
      %62 = vector.extract %61[0, 0, 0] : f32 from vector<1x1x1xf32>
      %63 = vector.broadcast %62 : f32 to vector<8x128xf32>
      %64 = arith.addf %57, %63 : vector<8x128xf32>
      %c0_18 = arith.constant 0 : index
      %c0_19 = arith.constant 0 : index
      %65 = vector.load %arg4[%c0_18, %c0_19] : memref<8x128xf32, #tpu.memory_space<vmem>>, vector<8x128xf32>
      tpu.vector_store %arg4[%c0_18, %c0_19], %64 {strides = array<i32>} : memref<8x128xf32, #tpu.memory_space<vmem>>, vector<8x128xf32>,
    } else {
    }
    return
  }
  func.func @transform_0(%arg0: i32, %arg1: i32) -> (i32, i32) {
    %c4_i32 = arith.constant 4 : i32
    %0 = arith.muli %arg0, %c4_i32 : i32
    %1 = arith.addi %0, %arg1 : i32
    %c0_i32 = arith.constant 0 : i32
    %c0_i32_0 = arith.constant 0 : i32
    return %1, %c0_i32 : i32, i32
  }
  func.func @transform_1(%arg0: i32, %arg1: i32) -> (i32, i32) {
    %c4_i32 = arith.constant 4 : i32
    %0 = arith.muli %arg0, %c4_i32 : i32
    %1 = arith.addi %0, %arg1 : i32
    %c0_i32 = arith.constant 0 : i32
    %c0_i32_0 = arith.constant 0 : i32
    return %1, %c0_i32 : i32, i32
  }
  func.func @transform_2(%arg0: i32, %arg1: i32) -> (i32, i32) {
    %c0_i32 = arith.constant 0 : i32
    %c0_i32_0 = arith.constant 0 : i32
    return %arg0, %c0_i32 : i32, i32
  }
}

</mosaic_0001>

<llo_original>
// kernel: tpu_custom_call.1
$region0: #{tpu_custom_call.1}
  #allocation0 [shape = 'u32[]', space=smem, size = 0x4, offset = 0x4, fixed_abs, tag = 'smem constant byte address 0x4 - core index']
  #allocation1 [shape = 'u32[144,128]{1,0:T(1,128)}', space=vmem, size = 0x12000, scoped, tag = 'internal scratch']
  #allocation2 [shape = 'f32[1,16]{1,0:T(1,128)}', space=vmem, size = 0x200, scoped, tag = 'scratch operand']
  %s0 = inlined_call_operand.vmem [shape: f32[64,128], index: 0, kind: input, shape index: {}]
  %s1 = inlined_call_operand.vmem [shape: f32[64,16], index: 1, kind: input, shape index: {}]
  %s2 = inlined_call_operand.hbm [shape: f32[16,128], index: 2, kind: output, shape index: {}]
  %s3 = sld [smem:[#allocation0]]
  $region49: #{tpu_custom_call.1} parent=0
    _
  %s5 = ssub.s32 1, %s3
  %s6 = scalar_select 0, %s5, %s3
  $region1: #{tpu_custom_call.1} parent=0
    #allocation3 [shape = 'u8[8192]{0}', space=vmem, size = 0x2000, scoped, tag = 'output window, operand 0']
    #allocation4 [shape = 's32[2]{0}', space=sflag, size = 0x8, scoped, tag = 'scoped memory for tpu_custom_call.1']
    %7 = vsyncpa [#allocation4], 0
    %s8 = scalar_lea.sflag [#allocation4], 1
    %9 = vsyncpa %s8, 0
    loop: start=0, step=1, limit=10
    $region2: #{tpu_custom_call.1} parent=1 // loop_pre_header
      _
    $region3: #{tpu_custom_call.1} parent=1 // loop_header
      %s11 = sphi 0, %s15
      %p12 = scmp.ge.s32.totalorder %s11, 10
      %s18 = sphi 0, %s30
      %s19 = sphi 0, %s26
      %s20 = sphi 0, %s18
      %s21 = sphi 0, %s19
      %s22 = sphi 0, %s20
      %s23 = sphi 0, %s21
      %s37 = sphi 0, %s39
      %s40 = sphi 0, %s37
      %s41 = sphi 0, %s40
      %s57 = sphi 0, %s41
      %s67 = sphi 0, %s69
      %s70 = sphi 0, %s67
      %s71 = sphi 0, %s70
      %s87 = sphi 0, %s71
      %s93 = sphi 0, %s95
      %s96 = sphi 0, %s93
      %s97 = sphi 0, %s96
      %s113 = sphi 0, %s97
    $region4: #{tpu_custom_call.1} parent=1 // loop_header_branch
      %14 = sbr.rel (%p12) target = $region8
    $region5: #{tpu_custom_call.1} parent=1 // loop_body
      %s16 = ssub.s32 %s11, 1
      %s17 = ssub.s32 %s11, 2
      %s24 = sadd.s32 1, %s19
      %p25 = scmp.ge.s32.totalorder %s24, 4
      %s26 = scalar_select %p25, 0, %s24
      %s27 = sadd.s32 1, %s18
      %s28 = scalar_select %p25, %s27, %s18
      %p29 = scmp.ge.s32.totalorder %s28, 2
      %s30 = scalar_select %p29, 0, %s28
      %s31 = smul.u32 %s18, 4
      %s32 = sadd.s32 %s31, %s19
      %s33 = smul.u32 %s30, 4
      %s34 = sadd.s32 %s33, %s26
      %s35 = ssub.s32 %s32, %s34
      %p36 = scmp.eq.s32.totalorder %s35, 0
      %s38 = sadd.s32 %s37, 1
      %s39 = scalar_select %p36, %s37, %s38
      %p42 = pneg %p36
      %p43 = scmp.eq.s32.totalorder %s11, 7
      %p44 = por %p42, %p43
      %p45 = scmp.ne.s32.totalorder %s37, %s40
      %p46 = scmp.eq.s32.totalorder %s11, 0
      %p47 = por %p45, %p46
      %p48 = scmp.ne.s32.totalorder %s37, %s40
      %p49 = scmp.eq.s32.totalorder %s16, 7
      %p50 = por %p48, %p49
      %p51 = scmp.ne.s32.totalorder %s40, %s41
      %p52 = scmp.eq.s32.totalorder %s16, 0
      %p53 = por %p51, %p52
      %p54 = scmp.ne.s32.totalorder %s40, %s41
      %p55 = scmp.eq.s32.totalorder %s17, 7
      %p56 = por %p54, %p55
      %p58 = scmp.ne.s32.totalorder %s41, %s57
      %p59 = scmp.eq.s32.totalorder %s17, 0
      %p60 = por %p58, %p59
      %s61 = smul.u32 %s18, 4
      %s62 = sadd.s32 %s61, %s19
      %s63 = smul.u32 %s30, 4
      %s64 = sadd.s32 %s63, %s26
      %s65 = ssub.s32 %s62, %s64
      %p66 = scmp.eq.s32.totalorder %s65, 0
      %s68 = sadd.s32 %s67, 1
      %s69 = scalar_select %p66, %s67, %s68
      %p72 = pneg %p66
      %p73 = scmp.eq.s32.totalorder %s11, 7
      %p74 = por %p72, %p73
      %p75 = scmp.ne.s32.totalorder %s67, %s70
      %p76 = scmp.eq.s32.totalorder %s11, 0
      %p77 = por %p75, %p76
      %p78 = scmp.ne.s32.totalorder %s67, %s70
      %p79 = scmp.eq.s32.totalorder %s16, 7
      %p80 = por %p78, %p79
      %p81 = scmp.ne.s32.totalorder %s70, %s71
      %p82 = scmp.eq.s32.totalorder %s16, 0
      %p83 = por %p81, %p82
      %p84 = scmp.ne.s32.totalorder %s70, %s71
      %p85 = scmp.eq.s32.totalorder %s17, 7
      %p86 = por %p84, %p85
      %p88 = scmp.ne.s32.totalorder %s71, %s87
      %p89 = scmp.eq.s32.totalorder %s17, 0
      %p90 = por %p88, %p89
      %s91 = ssub.s32 %s18, %s30
      %p92 = scmp.eq.s32.totalorder %s91, 0
      %s94 = sadd.s32 %s93, 1
      %s95 = scalar_select %p92, %s93, %s94
      %p98 = pneg %p92
      %p99 = scmp.eq.s32.totalorder %s11, 7
      %p100 = por %p98, %p99
      %p101 = scmp.ne.s32.totalorder %s93, %s96
      %p102 = scmp.eq.s32.totalorder %s11, 0
      %p103 = por %p101, %p102
      %p104 = scmp.ne.s32.totalorder %s93, %s96
      %p105 = scmp.eq.s32.totalorder %s16, 7
      %p106 = por %p104, %p105
      %p107 = scmp.ne.s32.totalorder %s96, %s97
      %p108 = scmp.eq.s32.totalorder %s16, 0
      %p109 = por %p107, %p108
      %p110 = scmp.ne.s32.totalorder %s96, %s97
      %p111 = scmp.eq.s32.totalorder %s17, 7
      %p112 = por %p110, %p111
      %p114 = scmp.ne.s32.totalorder %s97, %s113
      %p115 = scmp.eq.s32.totalorder %s17, 0
      %p116 = por %p114, %p115
      %p117 = scmp.le.s32.totalorder 1, %s11
      %p118 = scmp.lt.s32.totalorder %s11, 9
      %p119 = pnand %p117, %p118
      %p120 = pneg %p119
      // Predicated region
      $region9: #{tpu_custom_call.1} parent=5 // pred_check
        _
      $region10: #{tpu_custom_call.1} parent=5 // pred_check_branch
        %122 = sbr.rel (%p119) target = $region12
      $region11: #{tpu_custom_call.1} parent=5 // pred_region
        %s123 = ssub.s32 %s11, 1
      $region12: #{tpu_custom_call.1} parent=5 // pred_fallthru
        _
      %p124 = scmp.lt.s32.totalorder %s11, 8
      // Predicated region
      $region13: #{tpu_custom_call.1} parent=5 // pred_check
        %p125 = pneg %p124
      $region14: #{tpu_custom_call.1} parent=5 // pred_check_branch
        %127 = sbr.rel (%p125) target = $region16
      $region15: #{tpu_custom_call.1} parent=5 // pred_region
        // Predicated region
        $region17: #{tpu_custom_call.1} parent=15 // pred_check
          %p128 = pneg %p47
        $region18: #{tpu_custom_call.1} parent=15 // pred_check_branch
          %130 = sbr.rel (%p128) target = $region20
        $region19: #{tpu_custom_call.1} parent=15 // pred_region
          %s131 = smul.u32 %s18, 4
          %s132 = sadd.s32 %s131, %s19
          %p133 = scmp.lt.s32.totalorder %s132, 7
          %s134 = scalar_select %p133, %s132, 7
          %s135 = smul.addr %s134, 8
          %s136 = scalar_lea.vmem %s0, %s135
          %s137 = smul.u32 %s18, 4
          %s138 = sadd.s32 %s137, %s19
        $region20: #{tpu_custom_call.1} parent=15 // pred_fallthru
          _
        // Predicated region
        $region21: #{tpu_custom_call.1} parent=15 // pred_check
          %p139 = pneg %p77
        $region22: #{tpu_custom_call.1} parent=15 // pred_check_branch
          %141 = sbr.rel (%p139) target = $region24
        $region23: #{tpu_custom_call.1} parent=15 // pred_region
          %s142 = smul.u32 %s18, 4
          %s143 = sadd.s32 %s142, %s19
          %p144 = scmp.lt.s32.totalorder %s143, 7
          %s145 = scalar_select %p144, %s143, 7
          %s146 = smul.addr %s145, 8
          %s147 = scalar_lea.vmem %s1, %s146
          %s148 = smul.u32 %s18, 4
          %s149 = sadd.s32 %s148, %s19
        $region24: #{tpu_custom_call.1} parent=15 // pred_fallthru
          _
      $region16: #{tpu_custom_call.1} parent=5 // pred_fallthru
        _
      %p150 = scmp.le.s32.totalorder 1, %s11
      %p151 = scmp.lt.s32.totalorder %s11, 9
      %p152 = pnand %p150, %p151
      %p153 = pneg %p152
      // Predicated region
      $region25: #{tpu_custom_call.1} parent=5 // pred_check
        _
      $region26: #{tpu_custom_call.1} parent=5 // pred_check_branch
        %155 = sbr.rel (%p152) target = $region28
      $region27: #{tpu_custom_call.1} parent=5 // pred_region
        %s156 = ssub.s32 %s11, 1
        %s157 = smul.u32 %s20, 4
        %s158 = sadd.s32 %s157, %s21
        %p159 = scmp.lt.s32.totalorder %s158, 7
        %s160 = scalar_select %p159, %s158, 7
        %s161 = smul.addr %s160, 8
        %s162 = scalar_lea.vmem %s0, %s161
        %p163 = pneg %p53
        %p164 = pneg %p50
        %s165 = smul.u32 %s20, 4
        %s166 = sadd.s32 %s165, %s21
        %p167 = scmp.lt.s32.totalorder %s166, 7
        %s168 = scalar_select %p167, %s166, 7
        %s169 = smul.addr %s168, 8
        %s170 = scalar_lea.vmem %s1, %s169
        %p171 = pneg %p83
        %p172 = pneg %p80
        %p173 = pneg %p109
        %p174 = pneg %p106
        %s175 = sand.u32 %s96, 1
        %s176 = scalar_lea.sflag [#allocation4], %s175
        %s177 = sand.u32 %s96, 1
        %s178 = smul.addr %s177, 8
        %s179 = scalar_lea.vmem [#allocation3], %s178
        %s180 = smul.u32 %s20, 4
        %s181 = sadd.s32 %s180, %s21
        %p182 = scmp.lt.s32.totalorder %s181, 7
        %s183 = scalar_select %p182, %s181, 7
        %s184 = smul.addr %s183, 8
        %s185 = scalar_lea.vmem %s0, %s184
        %s186 = smul.u32 %s20, 4
        %s187 = sadd.s32 %s186, %s21
        %s188 = smul.u32 %s20, 4
        %s189 = sadd.s32 %s188, %s21
        %p190 = scmp.lt.s32.totalorder %s189, 7
        %s191 = scalar_select %p190, %s189, 7
        %s192 = smul.addr %s191, 8
        %s193 = scalar_lea.vmem %s1, %s192
        %s194 = smul.u32 %s20, 4
        %s195 = sadd.s32 %s194, %s21
        %p196 = scmp.eq.s32.totalorder %s21, 0
        // Predicated region
        $region29: #{tpu_custom_call.1} parent=27 // pred_check
          %p197 = pneg %p196
        $region30: #{tpu_custom_call.1} parent=27 // pred_check_branch
          %199 = sbr.rel (%p197) target = $region32
        $region31: #{tpu_custom_call.1} parent=27 // pred_region
          %vm200 = vcmask 122880
          %201 = vst.msk [vmem:[#allocation2] sm:$0x1] %vm200, 0.0
        $region32: #{tpu_custom_call.1} parent=27 // pred_fallthru
          _
        %v202 = vld [vmem:[%s185] sm:$0xff]
        %v203 = vlaneseq
        %v204 = vand.u32 %v203, 127
        %v205 = vand.u32 %v204, 7
        %v206 = vcvt.s32.f32 %v205
        %207 = vrot.lane.b32.xlu0 %v202, 127
        %v208 = vpop.permute.xlu0 %207
        %209 = vrot.lane.b32.xlu0 %v206, 127
        %v210 = vpop.permute.xlu0 %209
        %vm211 = vcmp.gt.f32.partialorder %v208, %v202
        %vm212 = vcmp.eq.f32.partialorder %v208, %v202
        %vm213 = vcmp.lt.f32.partialorder %v210, %v206
        %vm214 = vmand %vm212, %vm213
        %vm215 = vmor %vm211, %vm214
        %v216 = vsel %vm215, %v208, %v202
        %v217 = vsel %vm215, %v210, %v206
        %218 = vrot.lane.b32.xlu0 %v216, 126
        %v219 = vpop.permute.xlu0 %218
        %220 = vrot.lane.b32.xlu0 %v217, 126
        %v221 = vpop.permute.xlu0 %220
        %vm222 = vcmp.gt.f32.partialorder %v219, %v216
        %vm223 = vcmp.eq.f32.partialorder %v219, %v216
        %vm224 = vcmp.lt.f32.partialorder %v221, %v217
        %vm225 = vmand %vm223, %vm224
        %vm226 = vmor %vm222, %vm225
        %v227 = vsel %vm226, %v219, %v216
        %v228 = vsel %vm226, %v221, %v217
        %229 = vrot.lane.b32.xlu0 %v227, 124
        %v230 = vpop.permute.xlu0 %229
        %231 = vrot.lane.b32.xlu0 %v228, 124
        %v232 = vpop.permute.xlu0 %231
        %vm233 = vcmp.gt.f32.partialorder %v230, %v227
        %vm234 = vcmp.eq.f32.partialorder %v230, %v227
        %vm235 = vcmp.lt.f32.partialorder %v232, %v228
        %vm236 = vmand %vm234, %vm235
        %vm237 = vmor %vm233, %vm236
        %v238 = vsel %vm237, %v232, %v228
        %v239 = vlaneseq
        %v240 = vshrl.u32 %v239, 7
        %v241 = vadd.s32 %v240, 8
        %v242 = vadd.s32 %v240, 16
        %v243 = vadd.s32 %v240, 24
        %v244 = vadd.s32 %v240, 32
        %v245 = vadd.s32 %v240, 40
        %v246 = vadd.s32 %v240, 48
        %v247 = vadd.s32 %v240, 56
        %v248 = vadd.s32 %v240, 64
        %v249 = vadd.s32 %v240, 72
        %v250 = vadd.s32 %v240, 80
        %v251 = vadd.s32 %v240, 88
        %v252 = vadd.s32 %v240, 96
        %v253 = vadd.s32 %v240, 104
        %v254 = vadd.s32 %v240, 112
        %v255 = vadd.s32 %v240, 120
        %v256 = vmul.u32 %v204, 8
        %vm257 = vcmp.eq.s32.totalorder %v240, %v256
        %vm258 = vcmp.eq.s32.totalorder %v241, %v256
        %vm259 = vcmp.eq.s32.totalorder %v242, %v256
        %vm260 = vcmp.eq.s32.totalorder %v243, %v256
        %vm261 = vcmp.eq.s32.totalorder %v244, %v256
        %vm262 = vcmp.eq.s32.totalorder %v245, %v256
        %vm263 = vcmp.eq.s32.totalorder %v246, %v256
        %vm264 = vcmp.eq.s32.totalorder %v247, %v256
        %vm265 = vcmp.eq.s32.totalorder %v248, %v256
        %vm266 = vcmp.eq.s32.totalorder %v249, %v256
        %vm267 = vcmp.eq.s32.totalorder %v250, %v256
        %vm268 = vcmp.eq.s32.totalorder %v251, %v256
        %vm269 = vcmp.eq.s32.totalorder %v252, %v256
        %vm270 = vcmp.eq.s32.totalorder %v253, %v256
        %vm271 = vcmp.eq.s32.totalorder %v254, %v256
        %vm272 = vcmp.eq.s32.totalorder %v255, %v256
        %v273 = vsel %vm257, 1, 0
        %v274 = vsel %vm258, 1, 0
        %v275 = vsel %vm259, 1, 0
        %v276 = vsel %vm260, 1, 0
        %v277 = vsel %vm261, 1, 0
        %v278 = vsel %vm262, 1, 0
        %v279 = vsel %vm263, 1, 0
        %v280 = vsel %vm264, 1, 0
        %v281 = vsel %vm265, 1, 0
        %v282 = vsel %vm266, 1, 0
        %v283 = vsel %vm267, 1, 0
        %v284 = vsel %vm268, 1, 0
        %v285 = vsel %vm269, 1, 0
        %v286 = vsel %vm270, 1, 0
        %v287 = vsel %vm271, 1, 0
        %v288 = vsel %vm272, 1, 0
        %v289 = vcvt.s32.f32 %v273
        %v290 = vcvt.s32.f32 %v274
        %v291 = vcvt.s32.f32 %v275
        %v292 = vcvt.s32.f32 %v276
        %v293 = vcvt.s32.f32 %v277
        %v294 = vcvt.s32.f32 %v278
        %v295 = vcvt.s32.f32 %v279
        %v296 = vcvt.s32.f32 %v280
        %v297 = vcvt.s32.f32 %v281
        %v298 = vcvt.s32.f32 %v282
        %v299 = vcvt.s32.f32 %v283
        %v300 = vcvt.s32.f32 %v284
        %v301 = vcvt.s32.f32 %v285
        %v302 = vcvt.s32.f32 %v286
        %v303 = vcvt.s32.f32 %v287
        %v304 = vcvt.s32.f32 %v288
        %305 = vmatprep.subr.mxu0 0.0
        %306 = vmatpush1.msra.mxu0 %v289
        %307 = vmatprep.subr.mxu0 0.0
        %308 = vmatpush1.msra.mxu0 %v290
        %309 = vmatprep.subr.mxu0 0.0
        %310 = vmatpush1.msra.mxu0 %v291
        %311 = vmatprep.subr.mxu0 0.0
        %312 = vmatpush1.msra.mxu0 %v292
        %313 = vmatprep.subr.mxu0 0.0
        %314 = vmatpush1.msra.mxu0 %v293
        %315 = vmatprep.subr.mxu0 0.0
        %316 = vmatpush1.msra.mxu0 %v294
        %317 = vmatprep.subr.mxu0 0.0
        %318 = vmatpush1.msra.mxu0 %v295
        %319 = vmatprep.subr.mxu0 0.0
        %320 = vmatpush1.msra.mxu0 %v296
        %321 = vmatprep.subr.mxu0 0.0
        %322 = vmatpush1.msra.mxu0 %v297
        %323 = vmatprep.subr.mxu0 0.0
        %324 = vmatpush1.msra.mxu0 %v298
        %325 = vmatprep.subr.mxu0 0.0
        %326 = vmatpush1.msra.mxu0 %v299
        %327 = vmatprep.subr.mxu0 0.0
        %328 = vmatpush1.msra.mxu0 %v300
        %329 = vmatprep.subr.mxu0 0.0
        %330 = vmatpush1.msra.mxu0 %v301
        %331 = vmatprep.subr.mxu0 0.0
        %332 = vmatpush1.msra.mxu0 %v302
        %333 = vmatprep.subr.mxu0 0.0
        %334 = vmatpush1.msra.mxu0 %v303
        %335 = vmatprep.subr.mxu0 0.0
        %336 = vmatpush1.msra.mxu0 %v304
        %337 = vmatprep.subr.mxu0 0.0
        %338 = vmatpush1.msra.mxu0 0.0
        %339 = vmatprep.subr.mxu0 0.0
        %340 = vmatpush1.msra.mxu0 0.0
        %341 = vmatprep.subr.mxu0 0.0
        %342 = vmatpush1.msra.mxu0 0.0
        %343 = vmatprep.subr.mxu0 0.0
        %344 = vmatpush1.msra.mxu0 0.0
        %345 = vmatprep.subr.mxu0 0.0
        %346 = vmatpush1.msra.mxu0 0.0
        %347 = vmatprep.subr.mxu0 0.0
        %348 = vmatpush1.msra.mxu0 0.0
        %349 = vmatprep.subr.mxu0 0.0
        %350 = vmatpush1.msra.mxu0 0.0
        %351 = vmatprep.subr.mxu0 0.0
        %352 = vmatpush1.msra.mxu0 0.0
        %353 = vmatprep.subr.mxu0 0.0
        %354 = vmatpush1.msra.mxu0 0.0
        %355 = vmatprep.subr.mxu0 0.0
        %356 = vmatpush1.msra.mxu0 0.0
        %357 = vmatprep.subr.mxu0 0.0
        %358 = vmatpush1.msra.mxu0 0.0
        %359 = vmatprep.subr.mxu0 0.0
        %360 = vmatpush1.msra.mxu0 0.0
        %361 = vmatprep.subr.mxu0 0.0
        %362 = vmatpush1.msra.mxu0 0.0
        %363 = vmatprep.subr.mxu0 0.0
        %364 = vmatpush1.msra.mxu0 0.0
        %365 = vmatprep.subr.mxu0 0.0
        %366 = vmatpush1.msra.mxu0 0.0
        %367 = vmatprep.subr.mxu0 0.0
        %368 = vmatpush1.msra.mxu0 0.0
        %369 = vmatprep.mubr.f32.mxu0 0.0
        %370 = vmatmul.mubr.f32.gmra.mrb[0].mxu0 %v238
        %v371 = vpop.f32.mrb[0].mxu0
        %v372 = vadd.f32 0.0, %v371
        %v373 = vpop.f32.mrb[0].mxu0
        %374 = vdwg.mxu0
        %v375 = vld [vmem:[%s193] sm:$0xff]
        %vm376 = vcmp.eq.f32.partialorder %v372, %v375
        %vm377 = vcmp.ge.f32.partialorder %v375, 0.0
        %vm378 = vmand %vm376, %vm377
        %v379 = vld [vmem:[#allocation2] sm:$0x1]
        %v380 = vsel %vm378, 1, 0
        %v381 = vcvt.s32.f32 %v380
        %vm382 = vcmask 130048
        %v383 = vsel %vm382, %v381, 0.0
        %v384 = vrot.slane %v383, 4
        %v385 = vadd.f32 %v383, %v384
        %v386 = vrot.slane %v385, 2
        %v387 = vadd.f32 %v385, %v386
        %v388 = vrot.slane %v387, 1
        %v389 = vadd.f32 %v387, %v388
        %v390 = vadd.f32 %v379, %v389
        %vm391 = vcmask 122880
        %392 = vst.msk [vmem:[#allocation2] sm:$0x1] %vm391, %v390
        %p393 = scmp.eq.s32.totalorder %s21, 3
        // Predicated region
        $region33: #{tpu_custom_call.1} parent=27 // pred_check
          %p394 = pneg %p393
        $region34: #{tpu_custom_call.1} parent=27 // pred_check_branch
          %396 = sbr.rel (%p394) target = $region36
        $region35: #{tpu_custom_call.1} parent=27 // pred_region
          %v397 = vld [vmem:[#allocation2] sm:$0x1]
          %v398 = vsel %vm391, %v397, 0.0
          %399 = vadd.xlane.f32.xlu0 %v398
          %v400 = vpop.xlane.xlu0 %399
          %v401 = vrot.slane %v400, 4
          %v402 = vadd.f32 %v400, %v401
          %v403 = vrot.slane %v402, 2
          %v404 = vadd.f32 %v402, %v403
          %v405 = vrot.slane %v404, 1
          %v406 = vadd.f32 %v404, %v405
          %s407 = vtos %v406
          %v408 = vstv %s407
          %v409 = vadd.f32 %v408, 0.0
          %410 = vst [vmem:[%s179] sm:$0xff] %v409
        $region36: #{tpu_custom_call.1} parent=27 // pred_fallthru
          _
        %s411 = sand.u32 %s96, 1
        %s412 = scalar_lea.sflag [#allocation4], %s411
        %s413 = sand.u32 %s96, 1
        %s414 = smul.addr %s413, 8
        %s415 = scalar_lea.vmem [#allocation3], %s414
        // Predicated region
        $region37: #{tpu_custom_call.1} parent=27 // pred_check
          %p416 = pneg %p106
        $region38: #{tpu_custom_call.1} parent=27 // pred_check_branch
          %418 = sbr.rel (%p416) target = $region40
        $region39: #{tpu_custom_call.1} parent=27 // pred_region
          %s420 = ssub.s32 128, 128
          %421 = vsyncadd %s412, %s420
          %s422 = smul.addr %s20, 128
          %s423 = scalar_lea.hbm %s2, %s422
          %s425 = sshll.u32 %s415, 4
          %s426 = int_to_ptr.vmem [resolvable:$true] %s425
          %428 = dma.vmem_to_hbm [thread:$0]  %s426, 128, %s423, %s412
        $region40: #{tpu_custom_call.1} parent=27 // pred_fallthru
          _
      $region28: #{tpu_custom_call.1} parent=5 // pred_fallthru
        _
      %p429 = scmp.le.s32.totalorder 2, %s11
      // Predicated region
      $region41: #{tpu_custom_call.1} parent=5 // pred_check
        %p430 = pneg %p429
      $region42: #{tpu_custom_call.1} parent=5 // pred_check_branch
        %432 = sbr.rel (%p430) target = $region44
      $region43: #{tpu_custom_call.1} parent=5 // pred_region
        %s433 = ssub.s32 %s11, 2
        // Predicated region
        $region45: #{tpu_custom_call.1} parent=43 // pred_check
          %p434 = pneg %p112
        $region46: #{tpu_custom_call.1} parent=43 // pred_check_branch
          %436 = sbr.rel (%p434) target = $region48
        $region47: #{tpu_custom_call.1} parent=43 // pred_region
          %s437 = sand.u32 %s97, 1
          %s438 = scalar_lea.sflag [#allocation4], %s437
          %s439 = sand.u32 %s97, 1
          %s440 = smul.addr %s439, 8
          %s441 = scalar_lea.vmem [#allocation3], %s440
          %442 = dma.done %s438, 128
        $region48: #{tpu_custom_call.1} parent=43 // pred_fallthru
          _
      $region44: #{tpu_custom_call.1} parent=5 // pred_fallthru
        _
    $region6: #{tpu_custom_call.1} parent=1 // loop_footer
      %s15 = sadd.s32 1, %s11
    $region7: #{tpu_custom_call.1} parent=1 // loop_footer_branch
      %10 = sbr.rel target = $region3
    $region8: #{tpu_custom_call.1} parent=1 // loop_exit
      _
    %443 = vsyncpa [#allocation4], 1
    %s444 = scalar_lea.sflag [#allocation4], 1
    %445 = vsyncpa %s444, 1

</llo_original>
